<compile_context>
chip_gen: v5e
topology: v5e:2x2
jax: 0.10.0
libtpu: 0.0.40
codegen_flags: <defaults>
</compile_context>

<pallas_src>
import jax
import jax.numpy as jnp
from jax.experimental import pallas as pl
from jax.experimental.pallas import tpu as pltpu


def _round_up(v, m):
    return ((v + m - 1) // m) * m


# ---------------------------------------------------------------------------
# Kernels
# ---------------------------------------------------------------------------

def _sage_kernel(a_ref, xk_ref, xi_ref, wl_ref, wr_ref, b_ref, o_ref, acc_ref):
    """SAGE (mean aggr): relu(agg @ W_l + x @ W_r + b), agg accumulated over k."""
    k = pl.program_id(1)

    @pl.when(k == 0)
    def _():
        acc_ref[...] = jnp.zeros_like(acc_ref)

    # Neighborhood aggregation tile: (tm, tk) @ (tk, C_in) accumulated in f32.
    acc_ref[...] += jnp.dot(a_ref[...], xk_ref[...],
                            preferred_element_type=jnp.float32)

    @pl.when(k == pl.num_programs(1) - 1)
    def _():
        agg = acc_ref[...].astype(jnp.bfloat16)          # bf16 into the MXU
        out = jnp.dot(agg, wl_ref[...], preferred_element_type=jnp.float32)
        out = out + jnp.dot(xi_ref[...], wr_ref[...],
                            preferred_element_type=jnp.float32)
        out = out + b_ref[...]                           # f32 bias add (VPU)
        o_ref[...] = jnp.maximum(out, 0.0).astype(o_ref.dtype)


def _gcn_kernel(a_ref, xk_ref, wl_ref, b_ref, o_ref, acc_ref):
    """GCN: relu(agg @ W + b) -- no root-weight matmul."""
    k = pl.program_id(1)

    @pl.when(k == 0)
    def _():
        acc_ref[...] = jnp.zeros_like(acc_ref)

    acc_ref[...] += jnp.dot(a_ref[...], xk_ref[...],
                            preferred_element_type=jnp.float32)

    @pl.when(k == pl.num_programs(1) - 1)
    def _():
        agg = acc_ref[...].astype(jnp.bfloat16)
        out = jnp.dot(agg, wl_ref[...], preferred_element_type=jnp.float32)
        out = out + b_ref[...]
        o_ref[...] = jnp.maximum(out, 0.0).astype(o_ref.dtype)


# ---------------------------------------------------------------------------
# Wrapper: padding + tiling + pallas_call
# ---------------------------------------------------------------------------

def gnn_conv_pallas(a_norm, x, w_l, w_r, bias, has_root):
    n, in_c = x.shape
    out_c = w_l.shape[1]

    # Lane-dense channel padding (>=128 on both contraction and output lanes).
    c_in_pad = _round_up(in_c, 128)
    c_out_pad = _round_up(out_c, 128)

    # Tile plan: tm x tk A-tiles, reduction over the N axis (last grid dim).
    # Sized conservatively so double-buffered tiles fit the 32 MiB scoped /
    # 64 MiB physical VMEM on v7x as well as v5e/v6e.
    if n <= 1024:
        tk = _round_up(n, 128)
        tm = 128
    else:
        tk = 512
        tm = 256
    n_pad = _round_up(n, tk)          # tk is a multiple of tm in both branches

    f32, bf16 = jnp.float32, jnp.bfloat16

    # Zero-pad and cast matmul operands to bf16 (halves the dominant A_norm
    # DMA stream; accumulation stays f32 inside the kernel).
    a_p = jnp.zeros((n_pad, n_pad), bf16).at[:n, :n].set(a_norm.astype(bf16))
    x_p = jnp.zeros((n_pad, c_in_pad), bf16).at[:n, :in_c].set(x.astype(bf16))
    wl_p = jnp.zeros((c_in_pad, c_out_pad), bf16).at[:in_c, :out_c].set(
        w_l.astype(bf16))
    b_p = jnp.zeros((1, c_out_pad), f32).at[:, :out_c].set(
        bias.astype(f32).reshape(1, out_c))

    grid = (n_pad // tm, n_pad // tk)

    a_spec = pl.BlockSpec((tm, tk), lambda i, k: (i, k))
    xk_spec = pl.BlockSpec((tk, c_in_pad), lambda i, k: (k, 0))
    xi_spec = pl.BlockSpec((tm, c_in_pad), lambda i, k: (i, 0))
    w_spec = pl.BlockSpec((c_in_pad, c_out_pad), lambda i, k: (0, 0))
    b_spec = pl.BlockSpec((1, c_out_pad), lambda i, k: (0, 0))
    o_spec = pl.BlockSpec((tm, c_out_pad), lambda i, k: (i, 0))

    compiler_params = pltpu.CompilerParams(
        dimension_semantics=("parallel", "arbitrary"),
        vmem_limit_bytes=64 * 1024 * 1024,
    )
    scratch = [pltpu.VMEM((tm, c_in_pad), jnp.float32)]
    out_shape = jax.ShapeDtypeStruct((n_pad, c_out_pad), f32)

    if has_root:
        wr_p = jnp.zeros((c_in_pad, c_out_pad), bf16).at[:in_c, :out_c].set(
            w_r.astype(bf16))
        out = pl.pallas_call(
            _sage_kernel,
            out_shape=out_shape,
            grid=grid,
            in_specs=[a_spec, xk_spec, xi_spec, w_spec, w_spec, b_spec],
            out_specs=o_spec,
            scratch_shapes=scratch,
            compiler_params=compiler_params,
        )(a_p, x_p, x_p, wl_p, wr_p, b_p)
    else:
        out = pl.pallas_call(
            _gcn_kernel,
            out_shape=out_shape,
            grid=grid,
            in_specs=[a_spec, xk_spec, w_spec, b_spec],
            out_specs=o_spec,
            scratch_shapes=scratch,
            compiler_params=compiler_params,
        )(a_p, x_p, wl_p, b_p)

    return out[:n, :out_c]


# ---------------------------------------------------------------------------
# Module
# ---------------------------------------------------------------------------

class GNNConv:
    """relu(gnn(x, edge_index)) with gnn in {'SAGE' (mean aggr), 'GCN'}."""

    def __init__(self, gnn, in_channels, out_channels, key):
        kind = gnn.lower()
        if 'sage' in kind:
            self.has_root = True
        elif 'gcn' in kind:
            self.has_root = False
        elif 'gat' in kind:
            # TODO(synk): GATConv (multi-head attention aggregation) not implemented.
            raise NotImplementedError("GATConv branch not implemented")
        else:
            raise ValueError(f"Unavailable gnn: {gnn}")
        self.in_channels = in_channels
        self.out_channels = out_channels

        k1, k2, k3 = jax.random.split(key, 3)
        scale = 1.0 / jnp.sqrt(jnp.float32(in_channels))
        self.w_l = jax.random.uniform(k1, (in_channels, out_channels),
                                      minval=-scale, maxval=scale,
                                      dtype=jnp.float32)
        if self.has_root:
            self.w_r = jax.random.uniform(k2, (in_channels, out_channels),
                                          minval=-scale, maxval=scale,
                                          dtype=jnp.float32)
            self.bias = jax.random.uniform(k3, (1, out_channels),
                                           minval=-scale, maxval=scale,
                                           dtype=jnp.float32)
        else:
            self.w_r = None                       # GCN: single weight matrix
            self.bias = jnp.zeros((1, out_channels), jnp.float32)  # PyG zero-init

    def _norm_adj(self, edge_index, num_nodes):
        src = edge_index[0]
        dst = edge_index[1]
        A = jnp.zeros((num_nodes, num_nodes), jnp.float32).at[dst, src].add(1.0)
        if self.has_root:
            # SAGE mean aggregation over incoming edges (scatter-mean semantics;
            # duplicate edges counted); isolated nodes aggregate to 0.
            deg = A.sum(axis=1, keepdims=True)
            return A / jnp.maximum(deg, 1.0)
        # GCN: add self-loops only where absent, then D^{-1/2} A D^{-1/2}.
        idx = jnp.arange(num_nodes)
        diag = jnp.diagonal(A)
        A = A.at[idx, idx].add(jnp.where(diag > 0, 0.0, 1.0))
        deg = A.sum(axis=1)
        dinv = jnp.where(deg > 0, 1.0 / jnp.sqrt(deg), 0.0)
        return A * dinv[:, None] * dinv[None, :]

    def __call__(self, x, edge_index):
        a_norm = self._norm_adj(edge_index, x.shape[0])
        return gnn_conv_pallas(a_norm, x, self.w_l, self.w_r, self.bias,
                               self.has_root)


# ---------------------------------------------------------------------------
# Self-test
# ---------------------------------------------------------------------------

def _reference(a_norm, x, w_l, w_r, bias, has_root):
    """Pure-JAX reference replicating the kernel's bf16-input / f32-acc math."""
    f32, bf16 = jnp.float32, jnp.bfloat16
    a = a_norm.astype(bf16).astype(f32)
    xb = x.astype(bf16).astype(f32)
    agg = (a @ xb).astype(bf16).astype(f32)
    out = agg @ w_l.astype(bf16).astype(f32)
    if has_root:
        out = out + xb @ w_r.astype(bf16).astype(f32)
    out = out + bias
    return jnp.maximum(out, 0.0)


if __name__ == "__main__":
    key = jax.random.PRNGKey(0)
    kx, ke, kp_sage, kp_gcn = jax.random.split(key, 4)

    N, E = 16, 48            # nodes, edges
    in_c, out_c = 16, 32     # channels

    x = jax.random.normal(kx, (N, in_c), dtype=jnp.float32)
    edge_index = jax.random.randint(ke, (2, E), 0, N, dtype=jnp.int32)

    for name, kparam in (("SAGE", kp_sage), ("GCN", kp_gcn)):
        model = GNNConv(name, in_c, out_c, kparam)
        out = model(x, edge_index)
        jax.block_until_ready(out)
        assert out.shape == (N, out_c), (name, out.shape)

        a_ref = model._norm_adj(edge_index, N)
        ref = _reference(a_ref, x, model.w_l, model.w_r, model.bias,
                         model.has_root)
        err = float(jnp.max(jnp.abs(out - ref)))
        assert jnp.allclose(out, ref, atol=1e-2, rtol=1e-2), (name, err)

    print("KERNEL_OK")
</pallas_src>

<mosaic_0001>
module attributes {stable_mosaic.version = 11 : i64} {
  func.func @_sage_kernel(%arg0: i32, %arg1: i32, %arg2: memref<128x128xbf16, #tpu.memory_space<vmem>>, %arg3: memref<128x128xbf16, #tpu.memory_space<vmem>>, %arg4: memref<128x128xbf16, #tpu.memory_space<vmem>>, %arg5: memref<128x128xbf16, #tpu.memory_space<vmem>>, %arg6: memref<128x128xbf16, #tpu.memory_space<vmem>>, %arg7: memref<1x128xf32, #tpu.memory_space<vmem>>, %arg8: memref<128x128xf32, #tpu.memory_space<vmem>>, %arg9: memref<128x128xf32, #tpu.memory_space<vmem>>) attributes {dimension_semantics = [#tpu.dimension_semantics<parallel>, #tpu.dimension_semantics<arbitrary>], iteration_bounds = array<i64: 1, 1>, scalar_prefetch = 0 : i64, scratch_operands = 1 : i64, tpu.core_type = #tpu.core_type<tc>, window_params = [{transform_indices = @transform_0, window_bounds = array<i64: 128, 128>}, {transform_indices = @transform_1, window_bounds = array<i64: 128, 128>}, {transform_indices = @transform_2, window_bounds = array<i64: 128, 128>}, {pipeline_mode = #tpu.pipeline_mode<synchronous>, transform_indices = @transform_3, window_bounds = array<i64: 128, 128>}, {pipeline_mode = #tpu.pipeline_mode<synchronous>, transform_indices = @transform_4, window_bounds = array<i64: 128, 128>}, {pipeline_mode = #tpu.pipeline_mode<synchronous>, transform_indices = @transform_5, window_bounds = array<i64: 1, 128>}, {transform_indices = @transform_6, window_bounds = array<i64: 128, 128>}]} {
    %c0_i32 = arith.constant 0 : i32
    %0 = arith.cmpi eq, %arg1, %c0_i32 : i32
    %1 = arith.extui %0 : i1 to i32
    %c0_i32_0 = arith.constant 0 : i32
    %2 = arith.cmpi ne, %1, %c0_i32_0 : i32
    scf.if %2 {
      %cst_10 = arith.constant 0.000000e+00 : f32
      %12 = vector.broadcast %cst_10 : f32 to vector<128x128xf32>
      %c0_11 = arith.constant 0 : index
      %c0_12 = arith.constant 0 : index
      %13 = vector.load %arg9[%c0_11, %c0_12] : memref<128x128xf32, #tpu.memory_space<vmem>>, vector<128x128xf32>
      tpu.vector_store %arg9[%c0_11, %c0_12], %12 {strides = array<i32>} : memref<128x128xf32, #tpu.memory_space<vmem>>, vector<128x128xf32>,
    } else {
    }
    %c0 = arith.constant 0 : index
    %c0_1 = arith.constant 0 : index
    %3 = vector.load %arg9[%c0, %c0_1] : memref<128x128xf32, #tpu.memory_space<vmem>>, vector<128x128xf32>
    %c0_2 = arith.constant 0 : index
    %c0_3 = arith.constant 0 : index
    %4 = vector.load %arg2[%c0_2, %c0_3] : memref<128x128xbf16, #tpu.memory_space<vmem>>, vector<128x128xbf16>
    %c0_4 = arith.constant 0 : index
    %c0_5 = arith.constant 0 : index
    %5 = vector.load %arg3[%c0_4, %c0_5] : memref<128x128xbf16, #tpu.memory_space<vmem>>, vector<128x128xbf16>
    %cst = arith.constant dense<0.000000e+00> : vector<128x128xf32>
    %6 = tpu.matmul %4, %5, %cst {dimension_numbers = #tpu.dot_dimension_numbers<[1], [0], [0], [1], [0, 0, 1, 1], [], []>} : vector<128x128xbf16>, vector<128x128xbf16>, vector<128x128xf32> -> vector<128x128xf32>
    %7 = arith.addf %3, %6 : vector<128x128xf32>
    %c0_6 = arith.constant 0 : index
    %c0_7 = arith.constant 0 : index
    %8 = vector.load %arg9[%c0_6, %c0_7] : memref<128x128xf32, #tpu.memory_space<vmem>>, vector<128x128xf32>
    tpu.vector_store %arg9[%c0_6, %c0_7], %7 {strides = array<i32>} : memref<128x128xf32, #tpu.memory_space<vmem>>, vector<128x128xf32>,
    %c0_i32_8 = arith.constant 0 : i32
    %9 = arith.cmpi eq, %arg1, %c0_i32_8 : i32
    %10 = arith.extui %9 : i1 to i32
    %c0_i32_9 = arith.constant 0 : i32
    %11 = arith.cmpi ne, %10, %c0_i32_9 : i32
    scf.if %11 {
      %c0_10 = arith.constant 0 : index
      %c0_11 = arith.constant 0 : index
      %12 = vector.load %arg9[%c0_10, %c0_11] : memref<128x128xf32, #tpu.memory_space<vmem>>, vector<128x128xf32>
      %13 = arith.truncf %12 : vector<128x128xf32> to vector<128x128xbf16>
      %c0_12 = arith.constant 0 : index
      %c0_13 = arith.constant 0 : index
      %14 = vector.load %arg5[%c0_12, %c0_13] : memref<128x128xbf16, #tpu.memory_space<vmem>>, vector<128x128xbf16>
      %cst_14 = arith.constant dense<0.000000e+00> : vector<128x128xf32>
      %15 = tpu.matmul %13, %14, %cst_14 {dimension_numbers = #tpu.dot_dimension_numbers<[1], [0], [0], [1], [0, 0, 1, 1], [], []>} : vector<128x128xbf16>, vector<128x128xbf16>, vector<128x128xf32> -> vector<128x128xf32>
      %c0_15 = arith.constant 0 : index
      %c0_16 = arith.constant 0 : index
      %16 = vector.load %arg4[%c0_15, %c0_16] : memref<128x128xbf16, #tpu.memory_space<vmem>>, vector<128x128xbf16>
      %c0_17 = arith.constant 0 : index
      %c0_18 = arith.constant 0 : index
      %17 = vector.load %arg6[%c0_17, %c0_18] : memref<128x128xbf16, #tpu.memory_space<vmem>>, vector<128x128xbf16>
      %cst_19 = arith.constant dense<0.000000e+00> : vector<128x128xf32>
      %18 = tpu.matmul %16, %17, %cst_19 {dimension_numbers = #tpu.dot_dimension_numbers<[1], [0], [0], [1], [0, 0, 1, 1], [], []>} : vector<128x128xbf16>, vector<128x128xbf16>, vector<128x128xf32> -> vector<128x128xf32>
      %19 = arith.addf %15, %18 : vector<128x128xf32>
      %c0_20 = arith.constant 0 : index
      %c0_21 = arith.constant 0 : index
      %20 = vector.load %arg7[%c0_20, %c0_21] : memref<1x128xf32, #tpu.memory_space<vmem>>, vector<1x128xf32>
      %21 = vector.broadcast %20 : vector<1x128xf32> to vector<128x128xf32>
      %22 = arith.addf %19, %21 : vector<128x128xf32>
      %cst_22 = arith.constant 0.000000e+00 : f32
      %23 = vector.broadcast %cst_22 : f32 to vector<128x128xf32>
      %24 = arith.maximumf %22, %23 : vector<128x128xf32>
      %c0_23 = arith.constant 0 : index
      %c0_24 = arith.constant 0 : index
      %25 = vector.load %arg8[%c0_23, %c0_24] : memref<128x128xf32, #tpu.memory_space<vmem>>, vector<128x128xf32>
      tpu.vector_store %arg8[%c0_23, %c0_24], %24 {strides = array<i32>} : memref<128x128xf32, #tpu.memory_space<vmem>>, vector<128x128xf32>,
    } else {
    }
    return
  }
  func.func @transform_0(%arg0: i32, %arg1: i32) -> (i32, i32) {
    %c0_i32 = arith.constant 0 : i32
    return %arg0, %arg1 : i32, i32
  }
  func.func @transform_1(%arg0: i32, %arg1: i32) -> (i32, i32) {
    %c0_i32 = arith.constant 0 : i32
    %c0_i32_0 = arith.constant 0 : i32
    return %arg1, %c0_i32 : i32, i32
  }
  func.func @transform_2(%arg0: i32, %arg1: i32) -> (i32, i32) {
    %c0_i32 = arith.constant 0 : i32
    %c0_i32_0 = arith.constant 0 : i32
    return %arg0, %c0_i32 : i32, i32
  }
  func.func @transform_3(%arg0: i32, %arg1: i32) -> (i32, i32) {
    %c0_i32 = arith.constant 0 : i32
    %c0_i32_0 = arith.constant 0 : i32
    %c0_i32_1 = arith.constant 0 : i32
    return %c0_i32, %c0_i32_0 : i32, i32
  }
  func.func @transform_4(%arg0: i32, %arg1: i32) -> (i32, i32) {
    %c0_i32 = arith.constant 0 : i32
    %c0_i32_0 = arith.constant 0 : i32
    %c0_i32_1 = arith.constant 0 : i32
    return %c0_i32, %c0_i32_0 : i32, i32
  }
  func.func @transform_5(%arg0: i32, %arg1: i32) -> (i32, i32) {
    %c0_i32 = arith.constant 0 : i32
    %c0_i32_0 = arith.constant 0 : i32
    %c0_i32_1 = arith.constant 0 : i32
    return %c0_i32, %c0_i32_0 : i32, i32
  }
  func.func @transform_6(%arg0: i32, %arg1: i32) -> (i32, i32) {
    %c0_i32 = arith.constant 0 : i32
    %c0_i32_0 = arith.constant 0 : i32
    return %arg0, %c0_i32 : i32, i32
  }
}

</mosaic_0001>

<llo_original>
// kernel: tpu_custom_call.1
$region0: #{tpu_custom_call.1}
  #allocation0 [shape = 'u32[]', space=smem, size = 0x4, offset = 0x4, fixed_abs, tag = 'smem constant byte address 0x4 - core index']
  #allocation1 [shape = 'u32[72,128]{1,0:T(1,128)}', space=vmem, size = 0x9000, scoped, tag = 'internal scratch']
  #allocation2 [shape = 'f32[128,128]{1,0:T(8,128)}', space=vmem, size = 0x10000, scoped, tag = 'scratch operand']
  %s0 = inlined_call_operand.hbm [shape: bf16[128,128], index: 0, kind: input, shape index: {}]
  %s1 = inlined_call_operand.hbm [shape: bf16[128,128], index: 1, kind: input, shape index: {}]
  %s2 = inlined_call_operand.hbm [shape: bf16[128,128], index: 2, kind: input, shape index: {}]
  %s3 = inlined_call_operand.hbm [shape: bf16[128,128], index: 3, kind: input, shape index: {}]
  %s4 = inlined_call_operand.hbm [shape: bf16[128,128], index: 4, kind: input, shape index: {}]
  %s5 = inlined_call_operand.vmem [shape: f32[1,128], index: 5, kind: input, shape index: {}]
  %s6 = inlined_call_operand.hbm [shape: f32[128,128], index: 6, kind: output, shape index: {}]
  %s7 = sld [smem:[#allocation0]]
  $region62: #{tpu_custom_call.1} parent=0
    _
  %s9 = ssub.s32 1, %s7
  %s10 = scalar_select 0, %s9, %s7
  $region1: #{tpu_custom_call.1} parent=0
    #allocation3 [shape = 'u8[32768]{0}', space=vmem, size = 0x8000, scoped, tag = 'input window, operand 0, single buffered']
    #allocation4 [shape = 's32[1]{0}', space=sflag, size = 0x4, scoped, tag = 'scoped memory for tpu_custom_call.1']
    #allocation5 [shape = 's32[1]{0}', space=sflag, size = 0x4, scoped, tag = 'scoped memory for tpu_custom_call.1']
    #allocation6 [shape = 'u8[32768]{0}', space=vmem, size = 0x8000, scoped, tag = 'input window, operand 1, single buffered']
    #allocation7 [shape = 's32[1]{0}', space=sflag, size = 0x4, scoped, tag = 'scoped memory for tpu_custom_call.1']
    #allocation8 [shape = 'u8[32768]{0}', space=vmem, size = 0x8000, scoped, tag = 'input window, operand 2, single buffered']
    #allocation9 [shape = 'u8[32768]{0}', space=vmem, size = 0x8000, scoped, tag = 'input window, operand 3, single buffered']
    #allocation10 [shape = 's32[1]{0}', space=sflag, size = 0x4, scoped, tag = 'scoped memory for tpu_custom_call.1']
    #allocation11 [shape = 'u8[32768]{0}', space=vmem, size = 0x8000, scoped, tag = 'input window, operand 4, single buffered']
    #allocation12 [shape = 'u8[65536]{0}', space=vmem, size = 0x10000, scoped, tag = 'output window, operand 0, single buffered']
    %11 = vsyncpa [#allocation4], 0
    %12 = vsyncpa [#allocation7], 0
    %13 = vsyncpa [#allocation10], 0
    %14 = vsyncpa [#allocation5], 0
    // Predicated region
    $region2: #{tpu_custom_call.1} parent=1 // pred_check
      _
    $region3: #{tpu_custom_call.1} parent=1 // pred_check_branch
      %16 = sbr.rel (0) target = $region5
    $region4: #{tpu_custom_call.1} parent=1 // pred_region
      %18 = vsyncadd [#allocation4], 0
      %s19 = sshll.u32 %s0, 4
      %s20 = int_to_ptr.hbm [resolvable:$true] %s19
      %s21 = sshll.u32 [#allocation3], 4
      %s22 = int_to_ptr.vmem [resolvable:$true] %s21
      %27 = dma.hbm_to_vmem [thread:$0]  %s20, 1024, %s22, [#allocation4], 64, 64, 4
    $region5: #{tpu_custom_call.1} parent=1 // pred_fallthru
      _
    // Predicated region
    $region6: #{tpu_custom_call.1} parent=1 // pred_check
      _
    $region7: #{tpu_custom_call.1} parent=1 // pred_check_branch
      %29 = sbr.rel (0) target = $region9
    $region8: #{tpu_custom_call.1} parent=1 // pred_region
      %31 = vsyncadd [#allocation7], 0
      %s32 = sshll.u32 %s1, 4
      %s33 = int_to_ptr.hbm [resolvable:$true] %s32
      %s34 = sshll.u32 [#allocation6], 4
      %s35 = int_to_ptr.vmem [resolvable:$true] %s34
      %40 = dma.hbm_to_vmem [thread:$0]  %s33, 1024, %s35, [#allocation7], 64, 64, 4
    $region9: #{tpu_custom_call.1} parent=1 // pred_fallthru
      _
    // Predicated region
    $region10: #{tpu_custom_call.1} parent=1 // pred_check
      _
    $region11: #{tpu_custom_call.1} parent=1 // pred_check_branch
      %42 = sbr.rel (0) target = $region13
    $region12: #{tpu_custom_call.1} parent=1 // pred_region
      %44 = vsyncadd [#allocation7], 0
      %s45 = sshll.u32 %s2, 4
      %s46 = int_to_ptr.hbm [resolvable:$true] %s45
      %s47 = sshll.u32 [#allocation8], 4
      %s48 = int_to_ptr.vmem [resolvable:$true] %s47
      %53 = dma.hbm_to_vmem [thread:$0]  %s46, 1024, %s48, [#allocation7], 64, 64, 4
    $region13: #{tpu_custom_call.1} parent=1 // pred_fallthru
      _
    // Predicated region
    $region14: #{tpu_custom_call.1} parent=1 // pred_check
      _
    $region15: #{tpu_custom_call.1} parent=1 // pred_check_branch
      %55 = sbr.rel (0) target = $region17
    $region16: #{tpu_custom_call.1} parent=1 // pred_region
      %57 = vsyncadd [#allocation10], 0
      %s58 = sshll.u32 %s3, 4
      %s59 = int_to_ptr.hbm [resolvable:$true] %s58
      %s60 = sshll.u32 [#allocation9], 4
      %s61 = int_to_ptr.vmem [resolvable:$true] %s60
      %66 = dma.hbm_to_vmem [thread:$0]  %s59, 1024, %s61, [#allocation10], 64, 64, 4
    $region17: #{tpu_custom_call.1} parent=1 // pred_fallthru
      _
    // Predicated region
    $region18: #{tpu_custom_call.1} parent=1 // pred_check
      _
    $region19: #{tpu_custom_call.1} parent=1 // pred_check_branch
      %68 = sbr.rel (0) target = $region21
    $region20: #{tpu_custom_call.1} parent=1 // pred_region
      %70 = vsyncadd [#allocation10], 0
      %s71 = sshll.u32 %s4, 4
      %s72 = int_to_ptr.hbm [resolvable:$true] %s71
      %s73 = sshll.u32 [#allocation11], 4
      %s74 = int_to_ptr.vmem [resolvable:$true] %s73
      %79 = dma.hbm_to_vmem [thread:$0]  %s72, 1024, %s74, [#allocation10], 64, 64, 4
    $region21: #{tpu_custom_call.1} parent=1 // pred_fallthru
      _
    // Predicated region
    $region22: #{tpu_custom_call.1} parent=1 // pred_check
      _
    $region23: #{tpu_custom_call.1} parent=1 // pred_check_branch
      %81 = sbr.rel (0) target = $region25
    $region24: #{tpu_custom_call.1} parent=1 // pred_region
      _
    $region25: #{tpu_custom_call.1} parent=1 // pred_fallthru
      _
    // Predicated region
    $region26: #{tpu_custom_call.1} parent=1 // pred_check
      _
    $region27: #{tpu_custom_call.1} parent=1 // pred_check_branch
      %83 = sbr.rel (0) target = $region29
    $region28: #{tpu_custom_call.1} parent=1 // pred_region
      %85 = dma.done [#allocation4], 1024
    $region29: #{tpu_custom_call.1} parent=1 // pred_fallthru
      _
    // Predicated region
    $region30: #{tpu_custom_call.1} parent=1 // pred_check
      _
    $region31: #{tpu_custom_call.1} parent=1 // pred_check_branch
      %87 = sbr.rel (0) target = $region33
    $region32: #{tpu_custom_call.1} parent=1 // pred_region
      %89 = dma.done [#allocation7], 1024
    $region33: #{tpu_custom_call.1} parent=1 // pred_fallthru
      _
    // Predicated region
    $region34: #{tpu_custom_call.1} parent=1 // pred_check
      _
    $region35: #{tpu_custom_call.1} parent=1 // pred_check_branch
      %91 = sbr.rel (0) target = $region37
    $region36: #{tpu_custom_call.1} parent=1 // pred_region
      %93 = dma.done [#allocation7], 1024
    $region37: #{tpu_custom_call.1} parent=1 // pred_fallthru
      _
    // Predicated region
    $region38: #{tpu_custom_call.1} parent=1 // pred_check
      _
    $region39: #{tpu_custom_call.1} parent=1 // pred_check_branch
      %95 = sbr.rel (0) target = $region41
    $region40: #{tpu_custom_call.1} parent=1 // pred_region
      %97 = dma.done [#allocation10], 1024
    $region41: #{tpu_custom_call.1} parent=1 // pred_fallthru
      _
    // Predicated region
    $region42: #{tpu_custom_call.1} parent=1 // pred_check
      _
    $region43: #{tpu_custom_call.1} parent=1 // pred_check_branch
      %99 = sbr.rel (0) target = $region45
    $region44: #{tpu_custom_call.1} parent=1 // pred_region
      %101 = dma.done [#allocation10], 1024
    $region45: #{tpu_custom_call.1} parent=1 // pred_fallthru
      _
    %p102 = scmp.eq.s32.totalorder 0, 0
    // Predicated region
    $region46: #{tpu_custom_call.1} parent=1 // pred_check
      %p103 = pneg %p102
    $region47: #{tpu_custom_call.1} parent=1 // pred_check_branch
      %105 = sbr.rel (%p103) target = $region49
    $region48: #{tpu_custom_call.1} parent=1 // pred_region
      %106 = vst [vmem:[#allocation2] sm:$0xff] 0.0
      %107 = vst [vmem:[#allocation2 + $0x8] sm:$0xff] 0.0
      %108 = vst [vmem:[#allocation2 + $0x10] sm:$0xff] 0.0
      %109 = vst [vmem:[#allocation2 + $0x18] sm:$0xff] 0.0
      %110 = vst [vmem:[#allocation2 + $0x20] sm:$0xff] 0.0
      %111 = vst [vmem:[#allocation2 + $0x28] sm:$0xff] 0.0
      %112 = vst [vmem:[#allocation2 + $0x30] sm:$0xff] 0.0
      %113 = vst [vmem:[#allocation2 + $0x38] sm:$0xff] 0.0
      %114 = vst [vmem:[#allocation2 + $0x40] sm:$0xff] 0.0
      %115 = vst [vmem:[#allocation2 + $0x48] sm:$0xff] 0.0
      %116 = vst [vmem:[#allocation2 + $0x50] sm:$0xff] 0.0
      %117 = vst [vmem:[#allocation2 + $0x58] sm:$0xff] 0.0
      %118 = vst [vmem:[#allocation2 + $0x60] sm:$0xff] 0.0
      %119 = vst [vmem:[#allocation2 + $0x68] sm:$0xff] 0.0
      %120 = vst [vmem:[#allocation2 + $0x70] sm:$0xff] 0.0
      %121 = vst [vmem:[#allocation2 + $0x78] sm:$0xff] 0.0
    $region49: #{tpu_custom_call.1} parent=1 // pred_fallthru
      _
    %v122 = vld [vmem:[#allocation2] sm:$0xff]
    %v123 = vld [vmem:[#allocation2 + $0x8] sm:$0xff]
    %v124 = vld [vmem:[#allocation2 + $0x10] sm:$0xff]
    %v125 = vld [vmem:[#allocation2 + $0x18] sm:$0xff]
    %v126 = vld [vmem:[#allocation2 + $0x20] sm:$0xff]
    %v127 = vld [vmem:[#allocation2 + $0x28] sm:$0xff]
    %v128 = vld [vmem:[#allocation2 + $0x30] sm:$0xff]
    %v129 = vld [vmem:[#allocation2 + $0x38] sm:$0xff]
    %v130 = vld [vmem:[#allocation2 + $0x40] sm:$0xff]
    %v131 = vld [vmem:[#allocation2 + $0x48] sm:$0xff]
    %v132 = vld [vmem:[#allocation2 + $0x50] sm:$0xff]
    %v133 = vld [vmem:[#allocation2 + $0x58] sm:$0xff]
    %v134 = vld [vmem:[#allocation2 + $0x60] sm:$0xff]
    %v135 = vld [vmem:[#allocation2 + $0x68] sm:$0xff]
    %v136 = vld [vmem:[#allocation2 + $0x70] sm:$0xff]
    %v137 = vld [vmem:[#allocation2 + $0x78] sm:$0xff]
    %v138 = vld [vmem:[#allocation3] sm:$0xf]
    %v139 = vld [vmem:[#allocation3 + $0x4] sm:$0xf]
    %v140 = vld [vmem:[#allocation3 + $0x8] sm:$0xf]
    %v141 = vld [vmem:[#allocation3 + $0xc] sm:$0xf]
    %v142 = vld [vmem:[#allocation3 + $0x10] sm:$0xf]
    %v143 = vld [vmem:[#allocation3 + $0x14] sm:$0xf]
    %v144 = vld [vmem:[#allocation3 + $0x18] sm:$0xf]
    %v145 = vld [vmem:[#allocation3 + $0x1c] sm:$0xf]
    %v146 = vld [vmem:[#allocation3 + $0x20] sm:$0xf]
    %v147 = vld [vmem:[#allocation3 + $0x24] sm:$0xf]
    %v148 = vld [vmem:[#allocation3 + $0x28] sm:$0xf]
    %v149 = vld [vmem:[#allocation3 + $0x2c] sm:$0xf]
    %v150 = vld [vmem:[#allocation3 + $0x30] sm:$0xf]
    %v151 = vld [vmem:[#allocation3 + $0x34] sm:$0xf]
    %v152 = vld [vmem:[#allocation3 + $0x38] sm:$0xf]
    %v153 = vld [vmem:[#allocation3 + $0x3c] sm:$0xf]
    %v154 = vld [vmem:[#allocation6] sm:$0xf]
    %v155 = vld [vmem:[#allocation6 + $0x4] sm:$0xf]
    %v156 = vld [vmem:[#allocation6 + $0x8] sm:$0xf]
    %v157 = vld [vmem:[#allocation6 + $0xc] sm:$0xf]
    %v158 = vld [vmem:[#allocation6 + $0x10] sm:$0xf]
    %v159 = vld [vmem:[#allocation6 + $0x14] sm:$0xf]
    %v160 = vld [vmem:[#allocation6 + $0x18] sm:$0xf]
    %v161 = vld [vmem:[#allocation6 + $0x1c] sm:$0xf]
    %v162 = vld [vmem:[#allocation6 + $0x20] sm:$0xf]
    %v163 = vld [vmem:[#allocation6 + $0x24] sm:$0xf]
    %v164 = vld [vmem:[#allocation6 + $0x28] sm:$0xf]
    %v165 = vld [vmem:[#allocation6 + $0x2c] sm:$0xf]
    %v166 = vld [vmem:[#allocation6 + $0x30] sm:$0xf]
    %v167 = vld [vmem:[#allocation6 + $0x34] sm:$0xf]
    %v168 = vld [vmem:[#allocation6 + $0x38] sm:$0xf]
    %v169 = vld [vmem:[#allocation6 + $0x3c] sm:$0xf]
    %v186 = vunpack.c.l.b16 %v138
    %v187 = vunpack.c.l.b16 %v139
    %v188 = vunpack.c.l.b16 %v140
    %v189 = vunpack.c.l.b16 %v141
    %v190 = vunpack.c.l.b16 %v142
    %v191 = vunpack.c.l.b16 %v143
    %v192 = vunpack.c.l.b16 %v144
    %v193 = vunpack.c.l.b16 %v145
    %v194 = vunpack.c.l.b16 %v146
    %v195 = vunpack.c.l.b16 %v147
    %v196 = vunpack.c.l.b16 %v148
    %v197 = vunpack.c.l.b16 %v149
    %v198 = vunpack.c.l.b16 %v150
    %v199 = vunpack.c.l.b16 %v151
    %v200 = vunpack.c.l.b16 %v152
    %v201 = vunpack.c.l.b16 %v153
    %v202 = vpack.c.b16 %v187, %v186
    %v203 = vpack.c.b16 %v189, %v188
    %v204 = vpack.c.b16 %v191, %v190
    %v205 = vpack.c.b16 %v193, %v192
    %v206 = vpack.c.b16 %v195, %v194
    %v207 = vpack.c.b16 %v197, %v196
    %v208 = vpack.c.b16 %v199, %v198
    %v209 = vpack.c.b16 %v201, %v200
    %v234 = vunpack.c.l.b16 %v154
    %v235 = vunpack.c.l.b16 %v155
    %v236 = vunpack.c.l.b16 %v156
    %v237 = vunpack.c.l.b16 %v157
    %v238 = vunpack.c.l.b16 %v158
    %v239 = vunpack.c.l.b16 %v159
    %v240 = vunpack.c.l.b16 %v160
    %v241 = vunpack.c.l.b16 %v161
    %v242 = vunpack.c.l.b16 %v162
    %v243 = vunpack.c.l.b16 %v163
    %v244 = vunpack.c.l.b16 %v164
    %v245 = vunpack.c.l.b16 %v165
    %v246 = vunpack.c.l.b16 %v166
    %v247 = vunpack.c.l.b16 %v167
    %v248 = vunpack.c.l.b16 %v168
    %v249 = vunpack.c.l.b16 %v169
    %v250 = vpack.c.b16 %v235, %v234
    %v251 = vpack.c.b16 %v237, %v236
    %v252 = vpack.c.b16 %v239, %v238
    %v253 = vpack.c.b16 %v241, %v240
    %v254 = vpack.c.b16 %v243, %v242
    %v255 = vpack.c.b16 %v245, %v244
    %v256 = vpack.c.b16 %v247, %v246
    %v257 = vpack.c.b16 %v249, %v248
    %266 = vmatpush.bf16.msra.mxu0 %v257
    %267 = vmatpush.bf16.msra.mxu0 %v256
    %268 = vmatpush.bf16.msra.mxu0 %v255
    %269 = vmatpush.bf16.msra.mxu0 %v254
    %270 = vmatpush.bf16.msra.mxu0 %v253
    %271 = vmatpush.bf16.msra.mxu0 %v252
    %272 = vmatpush.bf16.msra.mxu0 %v251
    %273 = vmatpush.bf16.msra.mxu0 %v250
    %274 = vmatmul.bf16.gmra.mxu0 %v202
    %v275 = vpop.f32.mrf.mxu0
    %v276 = vadd.f32 0.0, %v275
    %v277 = vpop.f32.mrf.mxu0
    %v278 = vadd.f32 0.0, %v277
    %279 = vmatmul.bf16.gmra.mxu0 %v203
    %v280 = vpop.f32.mrf.mxu0
    %v281 = vadd.f32 0.0, %v280
    %v282 = vpop.f32.mrf.mxu0
    %v283 = vadd.f32 0.0, %v282
    %284 = vmatmul.bf16.gmra.mxu0 %v204
    %v285 = vpop.f32.mrf.mxu0
    %v286 = vadd.f32 0.0, %v285
    %v287 = vpop.f32.mrf.mxu0
    %v288 = vadd.f32 0.0, %v287
    %289 = vmatmul.bf16.gmra.mxu0 %v205
    %v290 = vpop.f32.mrf.mxu0
    %v291 = vadd.f32 0.0, %v290
    %v292 = vpop.f32.mrf.mxu0
    %v293 = vadd.f32 0.0, %v292
    %294 = vmatmul.bf16.gmra.mxu0 %v206
    %v295 = vpop.f32.mrf.mxu0
    %v296 = vadd.f32 0.0, %v295
    %v297 = vpop.f32.mrf.mxu0
    %v298 = vadd.f32 0.0, %v297
    %299 = vmatmul.bf16.gmra.mxu0 %v207
    %v300 = vpop.f32.mrf.mxu0
    %v301 = vadd.f32 0.0, %v300
    %v302 = vpop.f32.mrf.mxu0
    %v303 = vadd.f32 0.0, %v302
    %304 = vmatmul.bf16.gmra.mxu0 %v208
    %v305 = vpop.f32.mrf.mxu0
    %v306 = vadd.f32 0.0, %v305
    %v307 = vpop.f32.mrf.mxu0
    %v308 = vadd.f32 0.0, %v307
    %309 = vmatmul.bf16.gmra.mxu0 %v209
    %v310 = vpop.f32.mrf.mxu0
    %v311 = vadd.f32 0.0, %v310
    %v312 = vpop.f32.mrf.mxu0
    %v313 = vadd.f32 0.0, %v312
    %314 = vdwg.mxu0
    %v315 = vadd.f32 %v122, %v276
    %v316 = vadd.f32 %v123, %v278
    %v317 = vadd.f32 %v124, %v281
    %v318 = vadd.f32 %v125, %v283
    %v319 = vadd.f32 %v126, %v286
    %v320 = vadd.f32 %v127, %v288
    %v321 = vadd.f32 %v128, %v291
    %v322 = vadd.f32 %v129, %v293
    %v323 = vadd.f32 %v130, %v296
    %v324 = vadd.f32 %v131, %v298
    %v325 = vadd.f32 %v132, %v301
    %v326 = vadd.f32 %v133, %v303
    %v327 = vadd.f32 %v134, %v306
    %v328 = vadd.f32 %v135, %v308
    %v329 = vadd.f32 %v136, %v311
    %v330 = vadd.f32 %v137, %v313
    %331 = vst [vmem:[#allocation2] sm:$0xff] %v315
    %332 = vst [vmem:[#allocation2 + $0x8] sm:$0xff] %v316
    %333 = vst [vmem:[#allocation2 + $0x10] sm:$0xff] %v317
    %334 = vst [vmem:[#allocation2 + $0x18] sm:$0xff] %v318
    %335 = vst [vmem:[#allocation2 + $0x20] sm:$0xff] %v319
    %336 = vst [vmem:[#allocation2 + $0x28] sm:$0xff] %v320
    %337 = vst [vmem:[#allocation2 + $0x30] sm:$0xff] %v321
    %338 = vst [vmem:[#allocation2 + $0x38] sm:$0xff] %v322
    %339 = vst [vmem:[#allocation2 + $0x40] sm:$0xff] %v323
    %340 = vst [vmem:[#allocation2 + $0x48] sm:$0xff] %v324
    %341 = vst [vmem:[#allocation2 + $0x50] sm:$0xff] %v325
    %342 = vst [vmem:[#allocation2 + $0x58] sm:$0xff] %v326
    %343 = vst [vmem:[#allocation2 + $0x60] sm:$0xff] %v327
    %344 = vst [vmem:[#allocation2 + $0x68] sm:$0xff] %v328
    %345 = vst [vmem:[#allocation2 + $0x70] sm:$0xff] %v329
    %346 = vst [vmem:[#allocation2 + $0x78] sm:$0xff] %v330
    // Predicated region
    $region50: #{tpu_custom_call.1} parent=1 // pred_check
      %p347 = pneg %p102
    $region51: #{tpu_custom_call.1} parent=1 // pred_check_branch
      %349 = sbr.rel (%p347) target = $region53
    $region52: #{tpu_custom_call.1} parent=1 // pred_region
      %v350 = vld [vmem:[#allocation2] sm:$0xff]
      %v351 = vld [vmem:[#allocation2 + $0x8] sm:$0xff]
      %v352 = vld [vmem:[#allocation2 + $0x10] sm:$0xff]
      %v353 = vld [vmem:[#allocation2 + $0x18] sm:$0xff]
      %v354 = vld [vmem:[#allocation2 + $0x20] sm:$0xff]
      %v355 = vld [vmem:[#allocation2 + $0x28] sm:$0xff]
      %v356 = vld [vmem:[#allocation2 + $0x30] sm:$0xff]
      %v357 = vld [vmem:[#allocation2 + $0x38] sm:$0xff]
      %v358 = vld [vmem:[#allocation2 + $0x40] sm:$0xff]
      %v359 = vld [vmem:[#allocation2 + $0x48] sm:$0xff]
      %v360 = vld [vmem:[#allocation2 + $0x50] sm:$0xff]
      %v361 = vld [vmem:[#allocation2 + $0x58] sm:$0xff]
      %v362 = vld [vmem:[#allocation2 + $0x60] sm:$0xff]
      %v363 = vld [vmem:[#allocation2 + $0x68] sm:$0xff]
      %v364 = vld [vmem:[#allocation2 + $0x70] sm:$0xff]
      %v365 = vld [vmem:[#allocation2 + $0x78] sm:$0xff]
      %v366 = vpack.c.bf16 %v351, %v350
      %v367 = vpack.c.bf16 %v353, %v352
      %v368 = vpack.c.bf16 %v355, %v354
      %v369 = vpack.c.bf16 %v357, %v356
      %v370 = vpack.c.bf16 %v359, %v358
      %v371 = vpack.c.bf16 %v361, %v360
      %v372 = vpack.c.bf16 %v363, %v362
      %v373 = vpack.c.bf16 %v365, %v364
      %v374 = vld [vmem:[#allocation9] sm:$0xf]
      %v375 = vld [vmem:[#allocation9 + $0x4] sm:$0xf]
      %v376 = vld [vmem:[#allocation9 + $0x8] sm:$0xf]
      %v377 = vld [vmem:[#allocation9 + $0xc] sm:$0xf]
      %v378 = vld [vmem:[#allocation9 + $0x10] sm:$0xf]
      %v379 = vld [vmem:[#allocation9 + $0x14] sm:$0xf]
      %v380 = vld [vmem:[#allocation9 + $0x18] sm:$0xf]
      %v381 = vld [vmem:[#allocation9 + $0x1c] sm:$0xf]
      %v382 = vld [vmem:[#allocation9 + $0x20] sm:$0xf]
      %v383 = vld [vmem:[#allocation9 + $0x24] sm:$0xf]
      %v384 = vld [vmem:[#allocation9 + $0x28] sm:$0xf]
      %v385 = vld [vmem:[#allocation9 + $0x2c] sm:$0xf]
      %v386 = vld [vmem:[#allocation9 + $0x30] sm:$0xf]
      %v387 = vld [vmem:[#allocation9 + $0x34] sm:$0xf]
      %v388 = vld [vmem:[#allocation9 + $0x38] sm:$0xf]
      %v389 = vld [vmem:[#allocation9 + $0x3c] sm:$0xf]
      %v390 = vld [vmem:[#allocation8] sm:$0xf]
      %v391 = vld [vmem:[#allocation8 + $0x4] sm:$0xf]
      %v392 = vld [vmem:[#allocation8 + $0x8] sm:$0xf]
      %v393 = vld [vmem:[#allocation8 + $0xc] sm:$0xf]
      %v394 = vld [vmem:[#allocation8 + $0x10] sm:$0xf]
      %v395 = vld [vmem:[#allocation8 + $0x14] sm:$0xf]
      %v396 = vld [vmem:[#allocation8 + $0x18] sm:$0xf]
      %v397 = vld [vmem:[#allocation8 + $0x1c] sm:$0xf]
      %v398 = vld [vmem:[#allocation8 + $0x20] sm:$0xf]
      %v399 = vld [vmem:[#allocation8 + $0x24] sm:$0xf]
      %v400 = vld [vmem:[#allocation8 + $0x28] sm:$0xf]
      %v401 = vld [vmem:[#allocation8 + $0x2c] sm:$0xf]
      %v402 = vld [vmem:[#allocation8 + $0x30] sm:$0xf]
      %v403 = vld [vmem:[#allocation8 + $0x34] sm:$0xf]
      %v404 = vld [vmem:[#allocation8 + $0x38] sm:$0xf]
      %v405 = vld [vmem:[#allocation8 + $0x3c] sm:$0xf]
      %v406 = vld [vmem:[#allocation11] sm:$0xf]
      %v407 = vld [vmem:[#allocation11 + $0x4] sm:$0xf]
      %v408 = vld [vmem:[#allocation11 + $0x8] sm:$0xf]
      %v409 = vld [vmem:[#allocation11 + $0xc] sm:$0xf]
      %v410 = vld [vmem:[#allocation11 + $0x10] sm:$0xf]
      %v411 = vld [vmem:[#allocation11 + $0x14] sm:$0xf]
      %v412 = vld [vmem:[#allocation11 + $0x18] sm:$0xf]
      %v413 = vld [vmem:[#allocation11 + $0x1c] sm:$0xf]
      %v414 = vld [vmem:[#allocation11 + $0x20] sm:$0xf]
      %v415 = vld [vmem:[#allocation11 + $0x24] sm:$0xf]
      %v416 = vld [vmem:[#allocation11 + $0x28] sm:$0xf]
      %v417 = vld [vmem:[#allocation11 + $0x2c] sm:$0xf]
      %v418 = vld [vmem:[#allocation11 + $0x30] sm:$0xf]
      %v419 = vld [vmem:[#allocation11 + $0x34] sm:$0xf]
      %v420 = vld [vmem:[#allocation11 + $0x38] sm:$0xf]
      %v421 = vld [vmem:[#allocation11 + $0x3c] sm:$0xf]
      %v438 = vunpack.c.l.b16 %v390
      %v439 = vunpack.c.l.b16 %v391
      %v440 = vunpack.c.l.b16 %v392
      %v441 = vunpack.c.l.b16 %v393
      %v442 = vunpack.c.l.b16 %v394
      %v443 = vunpack.c.l.b16 %v395
      %v444 = vunpack.c.l.b16 %v396
      %v445 = vunpack.c.l.b16 %v397
      %v446 = vunpack.c.l.b16 %v398
      %v447 = vunpack.c.l.b16 %v399
      %v448 = vunpack.c.l.b16 %v400
      %v449 = vunpack.c.l.b16 %v401
      %v450 = vunpack.c.l.b16 %v402
      %v451 = vunpack.c.l.b16 %v403
      %v452 = vunpack.c.l.b16 %v404
      %v453 = vunpack.c.l.b16 %v405
      %v454 = vpack.c.b16 %v439, %v438
      %v455 = vpack.c.b16 %v441, %v440
      %v456 = vpack.c.b16 %v443, %v442
      %v457 = vpack.c.b16 %v445, %v444
      %v458 = vpack.c.b16 %v447, %v446
      %v459 = vpack.c.b16 %v449, %v448
      %v460 = vpack.c.b16 %v451, %v450
      %v461 = vpack.c.b16 %v453, %v452
      %v486 = vunpack.c.l.b16 %v406
      %v487 = vunpack.c.l.b16 %v407
      %v488 = vunpack.c.l.b16 %v408
      %v489 = vunpack.c.l.b16 %v409
      %v490 = vunpack.c.l.b16 %v410
      %v491 = vunpack.c.l.b16 %v411
      %v492 = vunpack.c.l.b16 %v412
      %v493 = vunpack.c.l.b16 %v413
      %v494 = vunpack.c.l.b16 %v414
      %v495 = vunpack.c.l.b16 %v415
      %v496 = vunpack.c.l.b16 %v416
      %v497 = vunpack.c.l.b16 %v417
      %v498 = vunpack.c.l.b16 %v418
      %v499 = vunpack.c.l.b16 %v419
      %v500 = vunpack.c.l.b16 %v420
      %v501 = vunpack.c.l.b16 %v421
      %v502 = vpack.c.b16 %v487, %v486
      %v503 = vpack.c.b16 %v489, %v488
      %v504 = vpack.c.b16 %v491, %v490
      %v505 = vpack.c.b16 %v493, %v492
      %v506 = vpack.c.b16 %v495, %v494
      %v507 = vpack.c.b16 %v497, %v496
      %v508 = vpack.c.b16 %v499, %v498
      %v509 = vpack.c.b16 %v501, %v500
      %518 = vmatpush.bf16.msra.mxu0 %v509
      %519 = vmatpush.bf16.msra.mxu0 %v508
      %520 = vmatpush.bf16.msra.mxu0 %v507
      %521 = vmatpush.bf16.msra.mxu0 %v506
      %522 = vmatpush.bf16.msra.mxu0 %v505
      %523 = vmatpush.bf16.msra.mxu0 %v504
      %524 = vmatpush.bf16.msra.mxu0 %v503
      %525 = vmatpush.bf16.msra.mxu0 %v502
      %526 = vmatmul.bf16.gmra.mxu0 %v454
      %v527 = vpop.f32.mrf.mxu0
      %v528 = vadd.f32 0.0, %v527
      %v529 = vpop.f32.mrf.mxu0
      %v530 = vadd.f32 0.0, %v529
      %531 = vmatmul.bf16.gmra.mxu0 %v455
      %v532 = vpop.f32.mrf.mxu0
      %v533 = vadd.f32 0.0, %v532
      %v534 = vpop.f32.mrf.mxu0
      %v535 = vadd.f32 0.0, %v534
      %536 = vmatmul.bf16.gmra.mxu0 %v456
      %v537 = vpop.f32.mrf.mxu0
      %v538 = vadd.f32 0.0, %v537
      %v539 = vpop.f32.mrf.mxu0
      %v540 = vadd.f32 0.0, %v539
      %541 = vmatmul.bf16.gmra.mxu0 %v457
      %v542 = vpop.f32.mrf.mxu0
      %v543 = vadd.f32 0.0, %v542
      %v544 = vpop.f32.mrf.mxu0
      %v545 = vadd.f32 0.0, %v544
      %546 = vmatmul.bf16.gmra.mxu0 %v458
      %v547 = vpop.f32.mrf.mxu0
      %v548 = vadd.f32 0.0, %v547
      %v549 = vpop.f32.mrf.mxu0
      %v550 = vadd.f32 0.0, %v549
      %551 = vmatmul.bf16.gmra.mxu0 %v459
      %v552 = vpop.f32.mrf.mxu0
      %v553 = vadd.f32 0.0, %v552
      %v554 = vpop.f32.mrf.mxu0
      %v555 = vadd.f32 0.0, %v554
      %556 = vmatmul.bf16.gmra.mxu0 %v460
      %v557 = vpop.f32.mrf.mxu0
      %v558 = vadd.f32 0.0, %v557
      %v559 = vpop.f32.mrf.mxu0
      %v560 = vadd.f32 0.0, %v559
      %561 = vmatmul.bf16.gmra.mxu0 %v461
      %v562 = vpop.f32.mrf.mxu0
      %v563 = vadd.f32 0.0, %v562
      %v564 = vpop.f32.mrf.mxu0
      %v565 = vadd.f32 0.0, %v564
      %566 = vdwg.mxu0
      %v583 = vunpack.c.l.b16 %v374
      %v584 = vunpack.c.l.b16 %v375
      %v585 = vunpack.c.l.b16 %v376
      %v586 = vunpack.c.l.b16 %v377
      %v587 = vunpack.c.l.b16 %v378
      %v588 = vunpack.c.l.b16 %v379
      %v589 = vunpack.c.l.b16 %v380
      %v590 = vunpack.c.l.b16 %v381
      %v591 = vunpack.c.l.b16 %v382
      %v592 = vunpack.c.l.b16 %v383
      %v593 = vunpack.c.l.b16 %v384
      %v594 = vunpack.c.l.b16 %v385
      %v595 = vunpack.c.l.b16 %v386
      %v596 = vunpack.c.l.b16 %v387
      %v597 = vunpack.c.l.b16 %v388
      %v598 = vunpack.c.l.b16 %v389
      %v599 = vpack.c.b16 %v584, %v583
      %v600 = vpack.c.b16 %v586, %v585
      %v601 = vpack.c.b16 %v588, %v587
      %v602 = vpack.c.b16 %v590, %v589
      %v603 = vpack.c.b16 %v592, %v591
      %v604 = vpack.c.b16 %v594, %v593
      %v605 = vpack.c.b16 %v596, %v595
      %v606 = vpack.c.b16 %v598, %v597
      %615 = vmatpush.bf16.msra.mxu0 %v606
      %616 = vmatpush.bf16.msra.mxu0 %v605
      %617 = vmatpush.bf16.msra.mxu0 %v604
      %618 = vmatpush.bf16.msra.mxu0 %v603
      %619 = vmatpush.bf16.msra.mxu0 %v602
      %620 = vmatpush.bf16.msra.mxu0 %v601
      %621 = vmatpush.bf16.msra.mxu0 %v600
      %622 = vmatpush.bf16.msra.mxu0 %v599
      %623 = vmatmul.bf16.gmra.mxu0 %v366
      %v624 = vpop.f32.mrf.mxu0
      %v625 = vadd.f32 %v528, %v624
      %v626 = vpop.f32.mrf.mxu0
      %v627 = vadd.f32 %v530, %v626
      %628 = vmatmul.bf16.gmra.mxu0 %v367
      %v629 = vpop.f32.mrf.mxu0
      %v630 = vadd.f32 %v533, %v629
      %v631 = vpop.f32.mrf.mxu0
      %v632 = vadd.f32 %v535, %v631
      %633 = vmatmul.bf16.gmra.mxu0 %v368
      %v634 = vpop.f32.mrf.mxu0
      %v635 = vadd.f32 %v538, %v634
      %v636 = vpop.f32.mrf.mxu0
      %v637 = vadd.f32 %v540, %v636
      %638 = vmatmul.bf16.gmra.mxu0 %v369
      %v639 = vpop.f32.mrf.mxu0
      %v640 = vadd.f32 %v543, %v639
      %v641 = vpop.f32.mrf.mxu0
      %v642 = vadd.f32 %v545, %v641
      %643 = vmatmul.bf16.gmra.mxu0 %v370
      %v644 = vpop.f32.mrf.mxu0
      %v645 = vadd.f32 %v548, %v644
      %v646 = vpop.f32.mrf.mxu0
      %v647 = vadd.f32 %v550, %v646
      %648 = vmatmul.bf16.gmra.mxu0 %v371
      %v649 = vpop.f32.mrf.mxu0
      %v650 = vadd.f32 %v553, %v649
      %v651 = vpop.f32.mrf.mxu0
      %v652 = vadd.f32 %v555, %v651
      %653 = vmatmul.bf16.gmra.mxu0 %v372
      %v654 = vpop.f32.mrf.mxu0
      %v655 = vadd.f32 %v558, %v654
      %v656 = vpop.f32.mrf.mxu0
      %v657 = vadd.f32 %v560, %v656
      %658 = vmatmul.bf16.gmra.mxu0 %v373
      %v659 = vpop.f32.mrf.mxu0
      %v660 = vadd.f32 %v563, %v659
      %v661 = vpop.f32.mrf.mxu0
      %v662 = vadd.f32 %v565, %v661
      %663 = vdwg.mxu0
      %v664 = vld [vmem:[%s5] sm:$0x1]
      %v666 = vperm.slane %v664, 0
      %v668 = vadd.f32 %v625, %v666
      %v669 = vadd.f32 %v627, %v666
      %v670 = vadd.f32 %v630, %v666
      %v671 = vadd.f32 %v632, %v666
      %v672 = vadd.f32 %v635, %v666
      %v673 = vadd.f32 %v637, %v666
      %v674 = vadd.f32 %v640, %v666
      %v675 = vadd.f32 %v642, %v666
      %v676 = vadd.f32 %v645, %v666
      %v677 = vadd.f32 %v647, %v666
      %v678 = vadd.f32 %v650, %v666
      %v679 = vadd.f32 %v652, %v666
      %v680 = vadd.f32 %v655, %v666
      %v681 = vadd.f32 %v657, %v666
      %v682 = vadd.f32 %v660, %v666
      %v683 = vadd.f32 %v662, %v666
      %v684 = vmax.f32 %v668, 0.0
      %v685 = vmax.f32 %v669, 0.0
      %v686 = vmax.f32 %v670, 0.0
      %v687 = vmax.f32 %v671, 0.0
      %v688 = vmax.f32 %v672, 0.0
      %v689 = vmax.f32 %v673, 0.0
      %v690 = vmax.f32 %v674, 0.0
      %v691 = vmax.f32 %v675, 0.0
      %v692 = vmax.f32 %v676, 0.0
      %v693 = vmax.f32 %v677, 0.0
      %v694 = vmax.f32 %v678, 0.0
      %v695 = vmax.f32 %v679, 0.0
      %v696 = vmax.f32 %v680, 0.0
      %v697 = vmax.f32 %v681, 0.0
      %v698 = vmax.f32 %v682, 0.0
      %v699 = vmax.f32 %v683, 0.0
      %700 = vst [vmem:[#allocation12] sm:$0xff] %v684
      %701 = vst [vmem:[#allocation12 + $0x8] sm:$0xff] %v685
      %702 = vst [vmem:[#allocation12 + $0x10] sm:$0xff] %v686
      %703 = vst [vmem:[#allocation12 + $0x18] sm:$0xff] %v687
      %704 = vst [vmem:[#allocation12 + $0x20] sm:$0xff] %v688
      %705 = vst [vmem:[#allocation12 + $0x28] sm:$0xff] %v689
      %706 = vst [vmem:[#allocation12 + $0x30] sm:$0xff] %v690
      %707 = vst [vmem:[#allocation12 + $0x38] sm:$0xff] %v691
      %708 = vst [vmem:[#allocation12 + $0x40] sm:$0xff] %v692
      %709 = vst [vmem:[#allocation12 + $0x48] sm:$0xff] %v693
      %710 = vst [vmem:[#allocation12 + $0x50] sm:$0xff] %v694
      %711 = vst [vmem:[#allocation12 + $0x58] sm:$0xff] %v695
      %712 = vst [vmem:[#allocation12 + $0x60] sm:$0xff] %v696
      %713 = vst [vmem:[#allocation12 + $0x68] sm:$0xff] %v697
      %714 = vst [vmem:[#allocation12 + $0x70] sm:$0xff] %v698
      %715 = vst [vmem:[#allocation12 + $0x78] sm:$0xff] %v699
    $region53: #{tpu_custom_call.1} parent=1 // pred_fallthru
      _
    // Predicated region
    $region54: #{tpu_custom_call.1} parent=1 // pred_check
      _
    $region55: #{tpu_custom_call.1} parent=1 // pred_check_branch
      %717 = sbr.rel (0) target = $region57
    $region56: #{tpu_custom_call.1} parent=1 // pred_region
      %719 = vsyncadd [#allocation5], 0
      %s720 = sshll.u32 [#allocation12], 4
      %s721 = int_to_ptr.vmem [resolvable:$true] %s720
      %s722 = sshll.u32 %s6, 4
      %s723 = int_to_ptr.hbm [resolvable:$true] %s722
      %728 = dma.vmem_to_hbm [thread:$0]  %s721, 2048, %s723, [#allocation5], 128, 128, 8
    $region57: #{tpu_custom_call.1} parent=1 // pred_fallthru
      _
    // Predicated region
    $region58: #{tpu_custom_call.1} parent=1 // pred_check
      _
    $region59: #{tpu_custom_call.1} parent=1 // pred_check_branch
      %730 = sbr.rel (0) target = $region61
    $region60: #{tpu_custom_call.1} parent=1 // pred_region
      %732 = dma.done [#allocation5], 2048
    $region61: #{tpu_custom_call.1} parent=1 // pred_fallthru
      _
    %733 = vsyncpa [#allocation4], 1
    %734 = vsyncpa [#allocation7], 1
    %735 = vsyncpa [#allocation10], 1
    %736 = vsyncpa [#allocation5], 1

</llo_original>
